<compile_context>
chip_gen: v7x
topology: tpu7x:2x2x1
jax: 0.10.0
libtpu: 0.0.40
codegen_flags: <defaults>
</compile_context>

<pallas_src>
import jax
import jax.numpy as jnp
from jax.experimental import pallas as pl
from jax.experimental.pallas import tpu as pltpu

_LANE = 128                     # lanes per vreg
_ACC_SUB = 8                    # sublanes of the f32 vector accumulator
_BLOCK_BYTES = 2 * 1024 * 1024  # per-input block; 2 in x 2 bufs x 2 MiB = 8 MiB VMEM


def _make_bce_kernel(blk_rows, n_rows, needs_mask):
    """BCE partial-sum kernel over (blk_rows, 128) tiles.

    Grid = (num_chunks, steps_per_chunk).  Inner axis is the sequential
    reduction (each chunk's (1, 8, 128) output block stays resident in VMEM);
    outer axis produces independent partial sums (megacore-parallel on v7x).

    Per element (PyTorch nn.BCELoss):
        loss_i = -( y*clamp(log(x), -100) + (1-y)*clamp(log(1-x), -100) )
    The kernel accumulates the un-negated term
        t_i = log1mx + y*(log_x - log1mx)        # saves a mul+sub+neg per vreg
    and the final -1/N scale is applied in JAX.
    """

    def kernel(x_ref, y_ref, out_ref):
        i = pl.program_id(1)

        @pl.when(i == 0)
        def _():
            out_ref[...] = jnp.zeros_like(out_ref)

        x = x_ref[...].astype(jnp.float32)
        y = y_ref[...].astype(jnp.float32)

        # NOTE: jnp.log(1-x) (not log1p) to match PyTorch BCELoss formulation.
        log_x = jnp.maximum(jnp.log(x), -100.0)
        log_1mx = jnp.maximum(jnp.log(1.0 - x), -100.0)
        term = log_1mx + y * (log_x - log_1mx)

        if needs_mask:
            # Ragged last block: rows past n_rows hold unspecified data, so
            # select the term away (select, not multiply -- NaNs must not leak).
            rows_done = (pl.program_id(0) * pl.num_programs(1) + i) * blk_rows
            row_ids = jax.lax.broadcasted_iota(jnp.int32, (blk_rows, _LANE), 0)
            term = jnp.where(row_ids < (n_rows - rows_done), term, 0.0)

        # (blk_rows, 128) -> (blk_rows/8, 8, 128), reduce the leading dim:
        # pure VPU adds into the resident (1, 8, 128) output accumulator; no
        # cross-lane (XLU) reduce and no narrow store in the hot loop.
        out_ref[...] += jnp.sum(term.reshape(-1, _ACC_SUB, _LANE), axis=0)[None]

    return kernel


def _bce_sum(x, y):
    """Un-negated BCE sum in plain JAX (used only for the tiny ragged tail)."""
    x = x.astype(jnp.float32)
    y = y.astype(jnp.float32)
    log_x = jnp.maximum(jnp.log(x), -100.0)
    log_1mx = jnp.maximum(jnp.log(1.0 - x), -100.0)
    return jnp.sum(log_1mx + y * (log_x - log_1mx))


def loss_model_forward(inputs, labels, block_bytes=_BLOCK_BYTES):
    """Pallas equivalent of LossModel.forward (nn.BCELoss, reduction='mean')."""
    x = jnp.reshape(inputs, (-1,))   # native dtype pass-through; cast in-kernel
    y = jnp.reshape(labels, (-1,))
    n = x.shape[0]

    # Rows handled by the kernel: the whole (8, 128)-aligned prefix.  No padded
    # copy is ever materialized; the < 1152-element remainder goes to plain JAX.
    n_rows = (n // _LANE) // _ACC_SUB * _ACC_SUB
    n_kernel = n_rows * _LANE

    total = jnp.float32(0.0)

    if n_rows > 0:
        itemsizes = (jnp.dtype(x.dtype).itemsize, jnp.dtype(y.dtype).itemsize)
        # Sublane tile of the most tightly packed dtype (f32:8, bf16:16, i8:32).
        row_align = 8 * (4 // min(itemsizes))
        # Bytes-budgeted block: same HBM bytes per step for f32 and bf16.
        blk_rows_max = block_bytes // (_LANE * max(itemsizes))
        blk_rows_max = max(row_align, blk_rows_max // row_align * row_align)

        blk_rows = min(blk_rows_max, n_rows)
        n_blocks = pl.cdiv(n_rows, blk_rows)
        needs_mask = (n_rows % blk_rows) != 0
        # Two independent partial sums only when they split evenly (never adds
        # an extra all-padding block); pays off on multi-TensorCore chips
        # (v7x), neutral on single-TC v5e/v6e.
        # TODO(synk): on v7x, verify the "parallel" axis actually shards across
        # both TensorCores; if not, switch to pltpu.CORE_PARALLEL / pl.core_map.
        num_chunks = 2 if (n_blocks >= 2 and n_blocks % 2 == 0) else 1
        steps_per_chunk = n_blocks // num_chunks

        x2d = (x if n_kernel == n else x[:n_kernel]).reshape(n_rows, _LANE)
        y2d = (y if n_kernel == n else y[:n_kernel]).reshape(n_rows, _LANE)

        def in_map(c, i):
            return (c * steps_per_chunk + i, 0)

        partials = pl.pallas_call(
            _make_bce_kernel(blk_rows, n_rows, needs_mask),
            out_shape=jax.ShapeDtypeStruct(
                (num_chunks, _ACC_SUB, _LANE), jnp.float32),
            grid_spec=pltpu.PrefetchScalarGridSpec(
                num_scalar_prefetch=0,
                grid=(num_chunks, steps_per_chunk),
                in_specs=[
                    pl.BlockSpec((blk_rows, _LANE), in_map),
                    pl.BlockSpec((blk_rows, _LANE), in_map),
                ],
                out_specs=pl.BlockSpec(
                    (1, _ACC_SUB, _LANE), lambda c, i: (c, 0, 0)),
            ),
            compiler_params=pltpu.CompilerParams(
                dimension_semantics=("parallel", "arbitrary")),
        )(x2d, y2d)

        total = total + jnp.sum(partials)

    if n_kernel < n:
        total = total + _bce_sum(x[n_kernel:], y[n_kernel:])

    # BCE mean: the per-element negation is folded into this final scale.
    return -total / jnp.float32(n)


def _reference_bce(inputs, labels):
    x = jnp.reshape(inputs, (-1,)).astype(jnp.float32)
    y = jnp.reshape(labels, (-1,)).astype(jnp.float32)
    log_x = jnp.maximum(jnp.log(x), -100.0)
    log_1mx = jnp.maximum(jnp.log(1.0 - x), -100.0)
    return jnp.mean(-(y * log_x + (1.0 - y) * log_1mx))


if __name__ == "__main__":
    key = jax.random.PRNGKey(0)
    k1, k2, k3, k4, k5, k6 = jax.random.split(key, 6)

    fwd = jax.jit(loss_model_forward, static_argnames=("block_bytes",))

    # 1) Typical aligned case: flattened length multiple of 8*128, single block.
    inputs = jax.nn.sigmoid(jax.random.normal(k1, (2, 4, 16, 16), jnp.float32))
    labels = jax.random.uniform(k2, (2, 4, 16, 16), jnp.float32)
    loss = jax.block_until_ready(fwd(inputs, labels))
    ref = jax.block_until_ready(_reference_bce(inputs, labels))
    assert jnp.allclose(loss, ref, atol=1e-5, rtol=1e-5), (loss, ref)

    # 2) Tiny unaligned input: pure-JAX tail path (no kernel launch).
    inputs2 = jax.nn.sigmoid(jax.random.normal(k3, (3, 5, 7), jnp.float32))
    labels2 = jax.random.uniform(k4, (3, 5, 7), jnp.float32)
    loss2 = jax.block_until_ready(fwd(inputs2, labels2))
    ref2 = jax.block_until_ready(_reference_bce(inputs2, labels2))
    assert jnp.allclose(loss2, ref2, atol=1e-5, rtol=1e-5), (loss2, ref2)

    # 3) Multi-block + 2 chunks + masked ragged last block + JAX tail
    #    (small block_bytes so the path is exercised at a small shape).
    inputs3 = jax.nn.sigmoid(jax.random.normal(k5, (105, 128), jnp.float32))
    labels3 = jax.random.uniform(k6, (105, 128), jnp.float32)
    loss3 = jax.block_until_ready(fwd(inputs3, labels3, block_bytes=16 * 1024))
    ref3 = jax.block_until_ready(_reference_bce(inputs3, labels3))
    assert jnp.allclose(loss3, ref3, atol=1e-5, rtol=1e-5), (loss3, ref3)

    # 4) bf16 pass-through (halves HBM traffic; cast to f32 in-kernel).
    inputs4 = inputs.astype(jnp.bfloat16)
    labels4 = labels.astype(jnp.bfloat16)
    loss4 = jax.block_until_ready(fwd(inputs4, labels4))
    ref4 = jax.block_until_ready(_reference_bce(inputs4, labels4))
    assert jnp.allclose(loss4, ref4, atol=1e-4, rtol=1e-4), (loss4, ref4)

    print("KERNEL_OK")
</pallas_src>

<mosaic_0001>
module attributes {stable_mosaic.version = 11 : i64} {
  func.func @kernel(%arg0: i32, %arg1: i32, %arg2: memref<16x128xf32, #tpu.memory_space<vmem>>, %arg3: memref<16x128xf32, #tpu.memory_space<vmem>>, %arg4: memref<1x8x128xf32, #tpu.memory_space<vmem>>) attributes {dimension_semantics = [#tpu.dimension_semantics<parallel>, #tpu.dimension_semantics<arbitrary>], iteration_bounds = array<i64: 1, 1>, scalar_prefetch = 0 : i64, scratch_operands = 0 : i64, tpu.core_type = #tpu.core_type<tc>, window_params = [{transform_indices = @transform_0, window_bounds = array<i64: 16, 128>}, {transform_indices = @transform_1, window_bounds = array<i64: 16, 128>}, {transform_indices = @transform_2, window_bounds = array<i64: 1, 8, 128>}]} {
    %c0_i32 = arith.constant 0 : i32
    %0 = arith.cmpi eq, %arg1, %c0_i32 : i32
    %1 = arith.extui %0 : i1 to i32
    %c0_i32_0 = arith.constant 0 : i32
    %2 = arith.cmpi ne, %1, %c0_i32_0 : i32
    scf.if %2 {
      %cst_13 = arith.constant 0.000000e+00 : f32
      %22 = vector.broadcast %cst_13 : f32 to vector<1x8x128xf32>
      %c0_14 = arith.constant 0 : index
      %c0_15 = arith.constant 0 : index
      %c0_16 = arith.constant 0 : index
      %23 = vector.load %arg4[%c0_14, %c0_15, %c0_16] : memref<1x8x128xf32, #tpu.memory_space<vmem>>, vector<1x8x128xf32>
      tpu.vector_store %arg4[%c0_14, %c0_15, %c0_16], %22 {strides = array<i32>} : memref<1x8x128xf32, #tpu.memory_space<vmem>>, vector<1x8x128xf32>,
    } else {
    }
    %c0 = arith.constant 0 : index
    %c0_1 = arith.constant 0 : index
    %3 = vector.load %arg2[%c0, %c0_1] : memref<16x128xf32, #tpu.memory_space<vmem>>, vector<16x128xf32>
    %c0_2 = arith.constant 0 : index
    %c0_3 = arith.constant 0 : index
    %4 = vector.load %arg3[%c0_2, %c0_3] : memref<16x128xf32, #tpu.memory_space<vmem>>, vector<16x128xf32>
    %5 = math.log %3 : vector<16x128xf32>
    %cst = arith.constant -1.000000e+02 : f32
    %6 = vector.broadcast %cst : f32 to vector<16x128xf32>
    %7 = arith.maximumf %5, %6 : vector<16x128xf32>
    %cst_4 = arith.constant 1.000000e+00 : f32
    %8 = vector.broadcast %cst_4 : f32 to vector<16x128xf32>
    %9 = arith.subf %8, %3 : vector<16x128xf32>
    %10 = math.log %9 : vector<16x128xf32>
    %cst_5 = arith.constant -1.000000e+02 : f32
    %11 = vector.broadcast %cst_5 : f32 to vector<16x128xf32>
    %12 = arith.maximumf %10, %11 : vector<16x128xf32>
    %13 = arith.subf %7, %12 : vector<16x128xf32>
    %14 = arith.mulf %4, %13 : vector<16x128xf32>
    %15 = arith.addf %12, %14 : vector<16x128xf32>
    %c0_6 = arith.constant 0 : index
    %c0_7 = arith.constant 0 : index
    %c0_8 = arith.constant 0 : index
    %16 = vector.load %arg4[%c0_6, %c0_7, %c0_8] : memref<1x8x128xf32, #tpu.memory_space<vmem>>, vector<1x8x128xf32>
    %17 = vector.shape_cast %15 : vector<16x128xf32> to vector<2x8x128xf32>
    %cst_9 = arith.constant dense<0.000000e+00> : vector<8x128xf32>
    %18 = vector.multi_reduction <add>, %17, %cst_9 [0] : vector<2x8x128xf32> to vector<8x128xf32>
    %19 = vector.shape_cast %18 : vector<8x128xf32> to vector<1x8x128xf32>
    %20 = arith.addf %16, %19 : vector<1x8x128xf32>
    %c0_10 = arith.constant 0 : index
    %c0_11 = arith.constant 0 : index
    %c0_12 = arith.constant 0 : index
    %21 = vector.load %arg4[%c0_10, %c0_11, %c0_12] : memref<1x8x128xf32, #tpu.memory_space<vmem>>, vector<1x8x128xf32>
    tpu.vector_store %arg4[%c0_10, %c0_11, %c0_12], %20 {strides = array<i32>} : memref<1x8x128xf32, #tpu.memory_space<vmem>>, vector<1x8x128xf32>,
    return
  }
  func.func @transform_0(%arg0: i32, %arg1: i32) -> (i32, i32) {
    %c1_i32 = arith.constant 1 : i32
    %0 = arith.muli %arg0, %c1_i32 : i32
    %1 = arith.addi %0, %arg1 : i32
    %c0_i32 = arith.constant 0 : i32
    %c0_i32_0 = arith.constant 0 : i32
    return %1, %c0_i32 : i32, i32
  }
  func.func @transform_1(%arg0: i32, %arg1: i32) -> (i32, i32) {
    %c1_i32 = arith.constant 1 : i32
    %0 = arith.muli %arg0, %c1_i32 : i32
    %1 = arith.addi %0, %arg1 : i32
    %c0_i32 = arith.constant 0 : i32
    %c0_i32_0 = arith.constant 0 : i32
    return %1, %c0_i32 : i32, i32
  }
  func.func @transform_2(%arg0: i32, %arg1: i32) -> (i32, i32, i32) {
    %c0_i32 = arith.constant 0 : i32
    %c0_i32_0 = arith.constant 0 : i32
    %c0_i32_1 = arith.constant 0 : i32
    return %arg0, %c0_i32, %c0_i32_0 : i32, i32, i32
  }
}

</mosaic_0001>

<llo_original>
// kernel: loss_model_forward.1
$region0: #{loss_model_forward.1}
  #allocation0 [shape = 'u32[]', space=smem, size = 0x4, offset = 0x4, fixed_abs, tag = 'smem constant byte address 0x4 - core index']
  #allocation1 [shape = 'u32[144,128]{1,0:T(1,128)}', space=vmem, size = 0x12000, scoped, tag = 'internal scratch']
  %s0 = inlined_call_operand.vmem [shape: f32[16,128], index: 0, kind: input, shape index: {}]
  %s1 = inlined_call_operand.vmem [shape: f32[16,128], index: 1, kind: input, shape index: {}]
  %s2 = inlined_call_operand.vmem [shape: f32[1,8,128], index: 2, kind: output, shape index: {}]
  %s3 = sld [smem:[#allocation0]]
  $region22: #{loss_model_forward.1} parent=0
    _
  %s5 = ssub.s32 1, %s3
  %s6 = scalar_select 0, %s5, %s3
  // Predicated region
  $region2: #{loss_model_forward.1} parent=0 // pred_check
    _
  $region3: #{loss_model_forward.1} parent=0 // pred_check_branch
    %8 = sbr.rel (0) target = $region5
  $region4: #{loss_model_forward.1} parent=0 // pred_region
    %s9 = sadd.s32 0, 0
    %s10 = smul.u32 2, %s9
    %p11 = scmp.lt.s32.totalorder %s10, 1
    %s12 = scalar_select %p11, %s10, 1
    %s13 = smul.addr %s12, 8
    %s14 = scalar_lea.vmem %s0, %s13
    %s15 = sadd.s32 0, 0
    %s16 = smul.u32 2, %s15
  $region5: #{loss_model_forward.1} parent=0 // pred_fallthru
    _
  // Predicated region
  $region6: #{loss_model_forward.1} parent=0 // pred_check
    _
  $region7: #{loss_model_forward.1} parent=0 // pred_check_branch
    %18 = sbr.rel (0) target = $region9
  $region8: #{loss_model_forward.1} parent=0 // pred_region
    %s19 = sadd.s32 0, 0
    %s20 = smul.u32 2, %s19
    %p21 = scmp.lt.s32.totalorder %s20, 1
    %s22 = scalar_select %p21, %s20, 1
    %s23 = smul.addr %s22, 8
    %s24 = scalar_lea.vmem %s1, %s23
    %s25 = sadd.s32 0, 0
    %s26 = smul.u32 2, %s25
  $region9: #{loss_model_forward.1} parent=0 // pred_fallthru
    _
  %s27 = sadd.s32 0, 0
  %s28 = smul.u32 2, %s27
  %p29 = scmp.lt.s32.totalorder %s28, 1
  %s30 = scalar_select %p29, %s28, 1
  %s31 = smul.addr %s30, 8
  %s32 = scalar_lea.vmem %s0, %s31
  %s33 = sadd.s32 0, 0
  %s34 = smul.u32 2, %s33
  %p35 = scmp.lt.s32.totalorder %s34, 1
  %s36 = scalar_select %p35, %s34, 1
  %s37 = smul.addr %s36, 8
  %s38 = scalar_lea.vmem %s1, %s37
  %s39 = sadd.s32 0, 0
  %s40 = smul.u32 2, %s39
  %p41 = scmp.lt.s32.totalorder %s40, 1
  %s42 = scalar_select %p41, %s40, 1
  %s43 = smul.addr %s42, 8
  %s44 = scalar_lea.vmem %s0, %s43
  %s45 = sadd.s32 0, 0
  %s46 = smul.u32 2, %s45
  %s47 = sadd.s32 0, 0
  %s48 = smul.u32 2, %s47
  %p49 = scmp.lt.s32.totalorder %s48, 1
  %s50 = scalar_select %p49, %s48, 1
  %s51 = smul.addr %s50, 8
  %s52 = scalar_lea.vmem %s1, %s51
  %s53 = sadd.s32 0, 0
  %s54 = smul.u32 2, %s53
  %p55 = scmp.eq.s32.totalorder 0, 0
  // Predicated region
  $region10: #{loss_model_forward.1} parent=0 // pred_check
    %p56 = pneg %p55
  $region11: #{loss_model_forward.1} parent=0 // pred_check_branch
    %58 = sbr.rel (%p56) target = $region13
  $region12: #{loss_model_forward.1} parent=0 // pred_region
    %59 = vst [vmem:[%s2] sm:$0xff] 0.0
  $region13: #{loss_model_forward.1} parent=0 // pred_fallthru
    _
  %v60 = vld [vmem:[%s44] sm:$0xff]
  %v61 = vld [vmem:[%s44 + $0x8] sm:$0xff]
  %v62 = vld [vmem:[%s52] sm:$0xff]
  %v63 = vld [vmem:[%s52 + $0x8] sm:$0xff]
  %v64 = vlog2.pop %v60
  %v65 = vmul.f32 %v64, 0.6931472
  %v66 = vlog2.pop %v61
  %v67 = vmul.f32 %v66, 0.6931472
  %v68 = vmax.f32 %v65, -100.0
  %v69 = vmax.f32 %v67, -100.0
  %v70 = vsub.f32 1.0, %v60
  %v71 = vsub.f32 1.0, %v61
  %v72 = vlog2.pop %v70
  %v73 = vmul.f32 %v72, 0.6931472
  %v74 = vlog2.pop %v71
  %v75 = vmul.f32 %v74, 0.6931472
  %v76 = vmax.f32 %v73, -100.0
  %v77 = vmax.f32 %v75, -100.0
  %v78 = vsub.f32 %v68, %v76
  %v79 = vsub.f32 %v69, %v77
  %v80 = vmul.f32 %v62, %v78
  %v81 = vmul.f32 %v63, %v79
  %v82 = vadd.f32 %v76, %v80
  %v83 = vadd.f32 %v77, %v81
  %v84 = vld [vmem:[%s2] sm:$0xff]
  %v85 = vadd.f32 %v82, %v83
  %v86 = vadd.f32 %v84, %v85
  %87 = vst [vmem:[%s2] sm:$0xff] %v86
  // Predicated region
  $region14: #{loss_model_forward.1} parent=0 // pred_check
    _
  $region15: #{loss_model_forward.1} parent=0 // pred_check_branch
    %89 = sbr.rel (0) target = $region17
  $region16: #{loss_model_forward.1} parent=0 // pred_region
    _
  $region17: #{loss_model_forward.1} parent=0 // pred_fallthru
    _
  // Predicated region
  $region18: #{loss_model_forward.1} parent=0 // pred_check
    _
  $region19: #{loss_model_forward.1} parent=0 // pred_check_branch
    %91 = sbr.rel (0) target = $region21
  $region20: #{loss_model_forward.1} parent=0 // pred_region
    _
  $region21: #{loss_model_forward.1} parent=0 // pred_fallthru
    _

</llo_original>
